<compile_context>
chip_gen: v5e
topology: v5e:2x2
jax: 0.10.0
libtpu: 0.0.40
codegen_flags: <defaults>
</compile_context>

<pallas_src>
import functools

import jax
import jax.numpy as jnp
from jax.experimental import pallas as pl
from jax.experimental.pallas import tpu as pltpu


# ---------------------------------------------------------------------------
# Fused kernel body (built per static shape configuration).
# ---------------------------------------------------------------------------
def _make_downscale_kernel(Ho, Wo, scale):
    s = scale
    Wh = Wo + 3                # per-phase flattened row width (conv1 input)
    M1 = Ho * Wh - 3           # conv1 "wide" output length (junk cols dropped later)
    W2p = Wo + 2               # replication-padded row width (conv2 input)
    M2 = Ho * W2p - 2          # conv2 "wide" output length

    def kernel(xph_ref, w1_ref, b1_ref, w2_ref, b2_ref, o_ref):
        # ---- conv1 (k=4s, stride s): transposed im2col built in VMEM from
        #      unit-stride lane slices of the phase-decomposed flattened input.
        phase_patches = []
        for p in range(s * s):
            xp = xph_ref[p]                                   # [C, (Ho+3)*Wh]
            wins = [xp[:, a * Wh + b: a * Wh + b + M1]        # [C, M1]
                    for a in range(4) for b in range(4)]
            phase_patches.append(jnp.concatenate(wins, axis=0))   # [16*C, M1]
        patches1 = jnp.concatenate(phase_patches, axis=0)         # [16*s*s*C, M1]

        acc1 = jnp.dot(w1_ref[...], patches1.astype(w1_ref.dtype),
                       preferred_element_type=jnp.float32)        # [Co1, M1]
        h1 = jnp.maximum(acc1 + b1_ref[...], 0.0)                 # f32 epilogue

        # ---- ReplicationPad2d(1) of the conv1 activation, assembled flat
        #      (row stride W2p) entirely in registers/VMEM.
        rows = [h1[:, oh * Wh: oh * Wh + Wo] for oh in range(Ho)]     # valid cols
        prow = [jnp.concatenate([r[:, :1], r, r[:, Wo - 1:Wo]], axis=1)
                for r in rows]                                        # [Co1, W2p]
        h1p = jnp.concatenate([prow[0]] + prow + [prow[-1]], axis=1)  # [Co1,(Ho+2)*W2p]

        # ---- conv2 (3x3, stride 1): same flattened-shift im2col trick.
        wins2 = [h1p[:, kh * W2p + kw: kh * W2p + kw + M2]            # [Co1, M2]
                 for kh in range(3) for kw in range(3)]
        patches2 = jnp.concatenate(wins2, axis=0)                     # [9*Co1, M2]
        acc2 = jnp.dot(w2_ref[...], patches2.astype(w2_ref.dtype),
                       preferred_element_type=jnp.float32)            # [Co2, M2]
        h2 = jnp.maximum(acc2 + b2_ref[...], 0.0)

        # ---- drop junk columns, store the whole block once (lane-dense as M grows).
        out_rows = [h2[:, oh * W2p: oh * W2p + Wo] for oh in range(Ho)]
        o_ref[...] = jnp.concatenate(out_rows, axis=1).astype(o_ref.dtype)

    return kernel


# ---------------------------------------------------------------------------
# One-time parameter repacking (PyTorch OIHW -> [Cout, K] matching patch order).
# ---------------------------------------------------------------------------
def prepare_params(w1, b1, w2, b2, scale=2):
    """w1: [Co1, C, 4s, 4s], w2: [Co2, Co1, 3, 3], b1: [Co1], b2: [Co2]."""
    s = scale
    Co1, C, k1, _ = w1.shape
    assert k1 == 4 * s
    # kh = s*a + i, kw = s*b + j; column order must match the kernel's patch rows:
    #   col = (((p = i*s + j)*4 + a)*4 + b)*C + ci
    w = w1.reshape(Co1, C, 4, s, 4, s)                 # [Co1, C, a, i, b, j]
    w = jnp.transpose(w, (0, 3, 5, 2, 4, 1))           # [Co1, i, j, a, b, C]
    w1_mat = w.reshape(Co1, s * s * 16 * C)
    Co2, Ci2, k2, _ = w2.shape
    assert k2 == 3
    w2_mat = jnp.transpose(w2, (0, 2, 3, 1)).reshape(Co2, 9 * Ci2)
    return w1_mat, b1.reshape(-1, 1), w2_mat, b2.reshape(-1, 1)


def _replication_pad_nchw(x, left, right, top, bottom):
    x = jnp.concatenate([jnp.repeat(x[:, :, :1, :], top, axis=2), x,
                         jnp.repeat(x[:, :, -1:, :], bottom, axis=2)], axis=2)
    x = jnp.concatenate([jnp.repeat(x[:, :, :, :1], left, axis=3), x,
                         jnp.repeat(x[:, :, :, -1:], right, axis=3)], axis=3)
    return x


# ---------------------------------------------------------------------------
# Forward pass (single fused pallas_call, grid over batch).
# ---------------------------------------------------------------------------
@functools.partial(jax.jit, static_argnames=("scale", "compute_dtype"))
def convolution_downscale_forward(x_nchw, prepared, scale=2,
                                  compute_dtype=jnp.float32):
    w1_mat, b1c, w2_mat, b2c = prepared
    N, C, H, W = x_nchw.shape
    s = scale
    assert H % s == 0 and W % s == 0, "spatial dims must be divisible by scale"
    Ho, Wo = H // s, W // s
    Co1, Co2 = w1_mat.shape[0], w2_mat.shape[0]

    # Replication pad + stride-removing phase decomposition (a pure permutation of
    # the padded input -> zero data amplification, unlike HBM-materialized im2col).
    pad = 3 * s
    pad_top = pad_left = pad // 2
    pad_bottom, pad_right = pad - pad_top, pad - pad_left
    x_pad = _replication_pad_nchw(x_nchw, pad_left, pad_right, pad_top, pad_bottom)
    Hp, Wp = H + pad, W + pad
    Hh, Wh = Hp // s, Wp // s                  # = Ho + 3, Wo + 3
    xph = x_pad.reshape(N, C, Hh, s, Wh, s)
    xph = jnp.transpose(xph, (0, 3, 5, 1, 2, 4))       # [N, i, j, C, Hh, Wh]
    xph = xph.reshape(N, s * s, C, Hh * Wh)            # phase p = i*s + j, flat spatial

    # bf16 MXU inputs on v6e/v7x (weights here; patches are cast in-kernel right
    # before each dot, accumulation stays f32 so the epilogue is v5e-safe).
    w1m = w1_mat.astype(compute_dtype)
    w2m = w2_mat.astype(compute_dtype)

    kernel = _make_downscale_kernel(Ho, Wo, s)

    out_flat = pl.pallas_call(
        kernel,
        out_shape=jax.ShapeDtypeStruct((N, Co2, Ho * Wo), jnp.float32),
        grid=(N,),
        in_specs=[
            pl.BlockSpec((None, s * s, C, Hh * Wh), lambda b: (b, 0, 0, 0)),
            pl.BlockSpec(w1m.shape, lambda b: (0, 0)),
            pl.BlockSpec(b1c.shape, lambda b: (0, 0)),
            pl.BlockSpec(w2m.shape, lambda b: (0, 0)),
            pl.BlockSpec(b2c.shape, lambda b: (0, 0)),
        ],
        out_specs=pl.BlockSpec((None, Co2, Ho * Wo), lambda b: (b, 0, 0)),
        compiler_params=pltpu.CompilerParams(
            dimension_semantics=("parallel",)),
    )(xph, w1m, b1c, w2m, b2c)

    return out_flat.reshape(N, Co2, Ho, Wo)


# ---------------------------------------------------------------------------
# Pure-JAX reference (XLA convs) for correctness checking.
# ---------------------------------------------------------------------------
def _forward_ref(x_nchw, params, scale=2):
    w1, b1, w2, b2 = params
    pad = 3 * scale
    pad_top = pad_left = pad // 2
    pad_bottom, pad_right = pad - pad_top, pad - pad_left
    x = _replication_pad_nchw(x_nchw, pad_left, pad_right, pad_top, pad_bottom)
    x = jax.lax.conv_general_dilated(
        x, w1, window_strides=(scale, scale), padding="VALID",
        dimension_numbers=("NCHW", "OIHW", "NCHW"))
    x = jnp.maximum(x + b1[None, :, None, None], 0.0)
    x = _replication_pad_nchw(x, 1, 1, 1, 1)
    x = jax.lax.conv_general_dilated(
        x, w2, window_strides=(1, 1), padding="VALID",
        dimension_numbers=("NCHW", "OIHW", "NCHW"))
    return jnp.maximum(x + b2[None, :, None, None], 0.0)


# ---------------------------------------------------------------------------
if __name__ == "__main__":
    channels, scale = 4, 2
    N, H, W = 2, 16, 16
    filter_size = scale * 4

    key = jax.random.PRNGKey(0)
    k_x, k_w1, k_b1, k_w2, k_b2 = jax.random.split(key, 5)

    x = jax.random.normal(k_x, (N, channels, H, W), dtype=jnp.float32)
    w1 = 0.1 * jax.random.normal(
        k_w1, (channels, channels, filter_size, filter_size), dtype=jnp.float32)
    b1 = 0.1 * jax.random.normal(k_b1, (channels,), dtype=jnp.float32)
    b2 = 0.1 * jax.random.normal(k_b2, (channels,), dtype=jnp.float32)
    w2 = 0.1 * jax.random.normal(k_w2, (channels, channels, 3, 3), dtype=jnp.float32)
    params = (w1, b1, w2, b2)

    # Weight repacking happens once, outside the per-call forward.
    prepared = prepare_params(w1, b1, w2, b2, scale=scale)

    # f32 path (v5e-safe): checked tightly against the XLA conv reference.
    out = jax.block_until_ready(
        convolution_downscale_forward(x, prepared, scale=scale))
    assert out.shape == (N, channels, H // scale, W // scale), out.shape

    ref = jax.block_until_ready(_forward_ref(x, params, scale=scale))
    err = float(jnp.max(jnp.abs(out - ref)))
    assert jnp.allclose(out, ref, atol=1e-3, rtol=1e-3), err

    # bf16 MXU-input path (v6e / v7x): f32 accumulation, looser tolerance.
    out_bf16 = jax.block_until_ready(
        convolution_downscale_forward(x, prepared, scale=scale,
                                      compute_dtype=jnp.bfloat16))
    err_bf16 = float(jnp.max(jnp.abs(out_bf16 - ref)))
    assert jnp.allclose(out_bf16, ref, atol=5e-2, rtol=5e-2), err_bf16

    print("KERNEL_OK")
</pallas_src>

<mosaic_0001>
module attributes {stable_mosaic.version = 11 : i64} {
  func.func @kernel(%arg0: i32, %arg1: memref<1x4x4x121xf32, #tpu.memory_space<vmem>>, %arg2: memref<4x256xf32, #tpu.memory_space<vmem>>, %arg3: memref<4x1xf32, #tpu.memory_space<vmem>>, %arg4: memref<4x36xf32, #tpu.memory_space<vmem>>, %arg5: memref<4x1xf32, #tpu.memory_space<vmem>>, %arg6: memref<1x4x64xf32, #tpu.memory_space<vmem>>) attributes {dimension_semantics = [#tpu.dimension_semantics<parallel>], iteration_bounds = array<i64: 2>, scalar_prefetch = 0 : i64, scratch_operands = 0 : i64, tpu.core_type = #tpu.core_type<tc>, window_params = [{transform_indices = @transform_0, window_bounds = array<i64: 1, 4, 4, 121>}, {pipeline_mode = #tpu.pipeline_mode<synchronous>, transform_indices = @transform_1, window_bounds = array<i64: 4, 256>}, {pipeline_mode = #tpu.pipeline_mode<synchronous>, transform_indices = @transform_2, window_bounds = array<i64: 4, 1>}, {pipeline_mode = #tpu.pipeline_mode<synchronous>, transform_indices = @transform_3, window_bounds = array<i64: 4, 36>}, {pipeline_mode = #tpu.pipeline_mode<synchronous>, transform_indices = @transform_4, window_bounds = array<i64: 4, 1>}, {transform_indices = @transform_5, window_bounds = array<i64: 1, 4, 64>}]} {
    %c0 = arith.constant 0 : index
    %c0_0 = arith.constant 0 : index
    %c0_1 = arith.constant 0 : index
    %c0_2 = arith.constant 0 : index
    %0 = vector.load %arg1[%c0, %c0_0, %c0_1, %c0_2] : memref<1x4x4x121xf32, #tpu.memory_space<vmem>>, vector<1x1x4x121xf32>
    %1 = vector.shape_cast %0 : vector<1x1x4x121xf32> to vector<4x121xf32>
    %2 = vector.extract_strided_slice %1 {offsets = [0, 0], sizes = [4, 85], strides = [1, 1]} : vector<4x121xf32> to vector<4x85xf32>
    %3 = vector.extract_strided_slice %1 {offsets = [0, 1], sizes = [4, 85], strides = [1, 1]} : vector<4x121xf32> to vector<4x85xf32>
    %4 = vector.extract_strided_slice %1 {offsets = [0, 2], sizes = [4, 85], strides = [1, 1]} : vector<4x121xf32> to vector<4x85xf32>
    %5 = vector.extract_strided_slice %1 {offsets = [0, 3], sizes = [4, 85], strides = [1, 1]} : vector<4x121xf32> to vector<4x85xf32>
    %6 = vector.extract_strided_slice %1 {offsets = [0, 11], sizes = [4, 85], strides = [1, 1]} : vector<4x121xf32> to vector<4x85xf32>
    %7 = vector.extract_strided_slice %1 {offsets = [0, 12], sizes = [4, 85], strides = [1, 1]} : vector<4x121xf32> to vector<4x85xf32>
    %8 = vector.extract_strided_slice %1 {offsets = [0, 13], sizes = [4, 85], strides = [1, 1]} : vector<4x121xf32> to vector<4x85xf32>
    %9 = vector.extract_strided_slice %1 {offsets = [0, 14], sizes = [4, 85], strides = [1, 1]} : vector<4x121xf32> to vector<4x85xf32>
    %10 = vector.extract_strided_slice %1 {offsets = [0, 22], sizes = [4, 85], strides = [1, 1]} : vector<4x121xf32> to vector<4x85xf32>
    %11 = vector.extract_strided_slice %1 {offsets = [0, 23], sizes = [4, 85], strides = [1, 1]} : vector<4x121xf32> to vector<4x85xf32>
    %12 = vector.extract_strided_slice %1 {offsets = [0, 24], sizes = [4, 85], strides = [1, 1]} : vector<4x121xf32> to vector<4x85xf32>
    %13 = vector.extract_strided_slice %1 {offsets = [0, 25], sizes = [4, 85], strides = [1, 1]} : vector<4x121xf32> to vector<4x85xf32>
    %14 = vector.extract_strided_slice %1 {offsets = [0, 33], sizes = [4, 85], strides = [1, 1]} : vector<4x121xf32> to vector<4x85xf32>
    %15 = vector.extract_strided_slice %1 {offsets = [0, 34], sizes = [4, 85], strides = [1, 1]} : vector<4x121xf32> to vector<4x85xf32>
    %16 = vector.extract_strided_slice %1 {offsets = [0, 35], sizes = [4, 85], strides = [1, 1]} : vector<4x121xf32> to vector<4x85xf32>
    %17 = vector.extract_strided_slice %1 {offsets = [0, 36], sizes = [4, 85], strides = [1, 1]} : vector<4x121xf32> to vector<4x85xf32>
    %18 = tpu.concatenate %2, %3, %4, %5, %6, %7, %8, %9, %10, %11, %12, %13, %14, %15, %16, %17 in 0 : vector<4x85xf32>, vector<4x85xf32>, vector<4x85xf32>, vector<4x85xf32>, vector<4x85xf32>, vector<4x85xf32>, vector<4x85xf32>, vector<4x85xf32>, vector<4x85xf32>, vector<4x85xf32>, vector<4x85xf32>, vector<4x85xf32>, vector<4x85xf32>, vector<4x85xf32>, vector<4x85xf32>, vector<4x85xf32> -> vector<64x85xf32>
    %c0_3 = arith.constant 0 : index
    %c1 = arith.constant 1 : index
    %c0_4 = arith.constant 0 : index
    %c0_5 = arith.constant 0 : index
    %19 = vector.load %arg1[%c0_3, %c1, %c0_4, %c0_5] : memref<1x4x4x121xf32, #tpu.memory_space<vmem>>, vector<1x1x4x121xf32>
    %20 = vector.shape_cast %19 : vector<1x1x4x121xf32> to vector<4x121xf32>
    %21 = vector.extract_strided_slice %20 {offsets = [0, 0], sizes = [4, 85], strides = [1, 1]} : vector<4x121xf32> to vector<4x85xf32>
    %22 = vector.extract_strided_slice %20 {offsets = [0, 1], sizes = [4, 85], strides = [1, 1]} : vector<4x121xf32> to vector<4x85xf32>
    %23 = vector.extract_strided_slice %20 {offsets = [0, 2], sizes = [4, 85], strides = [1, 1]} : vector<4x121xf32> to vector<4x85xf32>
    %24 = vector.extract_strided_slice %20 {offsets = [0, 3], sizes = [4, 85], strides = [1, 1]} : vector<4x121xf32> to vector<4x85xf32>
    %25 = vector.extract_strided_slice %20 {offsets = [0, 11], sizes = [4, 85], strides = [1, 1]} : vector<4x121xf32> to vector<4x85xf32>
    %26 = vector.extract_strided_slice %20 {offsets = [0, 12], sizes = [4, 85], strides = [1, 1]} : vector<4x121xf32> to vector<4x85xf32>
    %27 = vector.extract_strided_slice %20 {offsets = [0, 13], sizes = [4, 85], strides = [1, 1]} : vector<4x121xf32> to vector<4x85xf32>
    %28 = vector.extract_strided_slice %20 {offsets = [0, 14], sizes = [4, 85], strides = [1, 1]} : vector<4x121xf32> to vector<4x85xf32>
    %29 = vector.extract_strided_slice %20 {offsets = [0, 22], sizes = [4, 85], strides = [1, 1]} : vector<4x121xf32> to vector<4x85xf32>
    %30 = vector.extract_strided_slice %20 {offsets = [0, 23], sizes = [4, 85], strides = [1, 1]} : vector<4x121xf32> to vector<4x85xf32>
    %31 = vector.extract_strided_slice %20 {offsets = [0, 24], sizes = [4, 85], strides = [1, 1]} : vector<4x121xf32> to vector<4x85xf32>
    %32 = vector.extract_strided_slice %20 {offsets = [0, 25], sizes = [4, 85], strides = [1, 1]} : vector<4x121xf32> to vector<4x85xf32>
    %33 = vector.extract_strided_slice %20 {offsets = [0, 33], sizes = [4, 85], strides = [1, 1]} : vector<4x121xf32> to vector<4x85xf32>
    %34 = vector.extract_strided_slice %20 {offsets = [0, 34], sizes = [4, 85], strides = [1, 1]} : vector<4x121xf32> to vector<4x85xf32>
    %35 = vector.extract_strided_slice %20 {offsets = [0, 35], sizes = [4, 85], strides = [1, 1]} : vector<4x121xf32> to vector<4x85xf32>
    %36 = vector.extract_strided_slice %20 {offsets = [0, 36], sizes = [4, 85], strides = [1, 1]} : vector<4x121xf32> to vector<4x85xf32>
    %37 = tpu.concatenate %21, %22, %23, %24, %25, %26, %27, %28, %29, %30, %31, %32, %33, %34, %35, %36 in 0 : vector<4x85xf32>, vector<4x85xf32>, vector<4x85xf32>, vector<4x85xf32>, vector<4x85xf32>, vector<4x85xf32>, vector<4x85xf32>, vector<4x85xf32>, vector<4x85xf32>, vector<4x85xf32>, vector<4x85xf32>, vector<4x85xf32>, vector<4x85xf32>, vector<4x85xf32>, vector<4x85xf32>, vector<4x85xf32> -> vector<64x85xf32>
    %c0_6 = arith.constant 0 : index
    %c2 = arith.constant 2 : index
    %c0_7 = arith.constant 0 : index
    %c0_8 = arith.constant 0 : index
    %38 = vector.load %arg1[%c0_6, %c2, %c0_7, %c0_8] : memref<1x4x4x121xf32, #tpu.memory_space<vmem>>, vector<1x1x4x121xf32>
    %39 = vector.shape_cast %38 : vector<1x1x4x121xf32> to vector<4x121xf32>
    %40 = vector.extract_strided_slice %39 {offsets = [0, 0], sizes = [4, 85], strides = [1, 1]} : vector<4x121xf32> to vector<4x85xf32>
    %41 = vector.extract_strided_slice %39 {offsets = [0, 1], sizes = [4, 85], strides = [1, 1]} : vector<4x121xf32> to vector<4x85xf32>
    %42 = vector.extract_strided_slice %39 {offsets = [0, 2], sizes = [4, 85], strides = [1, 1]} : vector<4x121xf32> to vector<4x85xf32>
    %43 = vector.extract_strided_slice %39 {offsets = [0, 3], sizes = [4, 85], strides = [1, 1]} : vector<4x121xf32> to vector<4x85xf32>
    %44 = vector.extract_strided_slice %39 {offsets = [0, 11], sizes = [4, 85], strides = [1, 1]} : vector<4x121xf32> to vector<4x85xf32>
    %45 = vector.extract_strided_slice %39 {offsets = [0, 12], sizes = [4, 85], strides = [1, 1]} : vector<4x121xf32> to vector<4x85xf32>
    %46 = vector.extract_strided_slice %39 {offsets = [0, 13], sizes = [4, 85], strides = [1, 1]} : vector<4x121xf32> to vector<4x85xf32>
    %47 = vector.extract_strided_slice %39 {offsets = [0, 14], sizes = [4, 85], strides = [1, 1]} : vector<4x121xf32> to vector<4x85xf32>
    %48 = vector.extract_strided_slice %39 {offsets = [0, 22], sizes = [4, 85], strides = [1, 1]} : vector<4x121xf32> to vector<4x85xf32>
    %49 = vector.extract_strided_slice %39 {offsets = [0, 23], sizes = [4, 85], strides = [1, 1]} : vector<4x121xf32> to vector<4x85xf32>
    %50 = vector.extract_strided_slice %39 {offsets = [0, 24], sizes = [4, 85], strides = [1, 1]} : vector<4x121xf32> to vector<4x85xf32>
    %51 = vector.extract_strided_slice %39 {offsets = [0, 25], sizes = [4, 85], strides = [1, 1]} : vector<4x121xf32> to vector<4x85xf32>
    %52 = vector.extract_strided_slice %39 {offsets = [0, 33], sizes = [4, 85], strides = [1, 1]} : vector<4x121xf32> to vector<4x85xf32>
    %53 = vector.extract_strided_slice %39 {offsets = [0, 34], sizes = [4, 85], strides = [1, 1]} : vector<4x121xf32> to vector<4x85xf32>
    %54 = vector.extract_strided_slice %39 {offsets = [0, 35], sizes = [4, 85], strides = [1, 1]} : vector<4x121xf32> to vector<4x85xf32>
    %55 = vector.extract_strided_slice %39 {offsets = [0, 36], sizes = [4, 85], strides = [1, 1]} : vector<4x121xf32> to vector<4x85xf32>
    %56 = tpu.concatenate %40, %41, %42, %43, %44, %45, %46, %47, %48, %49, %50, %51, %52, %53, %54, %55 in 0 : vector<4x85xf32>, vector<4x85xf32>, vector<4x85xf32>, vector<4x85xf32>, vector<4x85xf32>, vector<4x85xf32>, vector<4x85xf32>, vector<4x85xf32>, vector<4x85xf32>, vector<4x85xf32>, vector<4x85xf32>, vector<4x85xf32>, vector<4x85xf32>, vector<4x85xf32>, vector<4x85xf32>, vector<4x85xf32> -> vector<64x85xf32>
    %c0_9 = arith.constant 0 : index
    %c3 = arith.constant 3 : index
    %c0_10 = arith.constant 0 : index
    %c0_11 = arith.constant 0 : index
    %57 = vector.load %arg1[%c0_9, %c3, %c0_10, %c0_11] : memref<1x4x4x121xf32, #tpu.memory_space<vmem>>, vector<1x1x4x121xf32>
    %58 = vector.shape_cast %57 : vector<1x1x4x121xf32> to vector<4x121xf32>
    %59 = vector.extract_strided_slice %58 {offsets = [0, 0], sizes = [4, 85], strides = [1, 1]} : vector<4x121xf32> to vector<4x85xf32>
    %60 = vector.extract_strided_slice %58 {offsets = [0, 1], sizes = [4, 85], strides = [1, 1]} : vector<4x121xf32> to vector<4x85xf32>
    %61 = vector.extract_strided_slice %58 {offsets = [0, 2], sizes = [4, 85], strides = [1, 1]} : vector<4x121xf32> to vector<4x85xf32>
    %62 = vector.extract_strided_slice %58 {offsets = [0, 3], sizes = [4, 85], strides = [1, 1]} : vector<4x121xf32> to vector<4x85xf32>
    %63 = vector.extract_strided_slice %58 {offsets = [0, 11], sizes = [4, 85], strides = [1, 1]} : vector<4x121xf32> to vector<4x85xf32>
    %64 = vector.extract_strided_slice %58 {offsets = [0, 12], sizes = [4, 85], strides = [1, 1]} : vector<4x121xf32> to vector<4x85xf32>
    %65 = vector.extract_strided_slice %58 {offsets = [0, 13], sizes = [4, 85], strides = [1, 1]} : vector<4x121xf32> to vector<4x85xf32>
    %66 = vector.extract_strided_slice %58 {offsets = [0, 14], sizes = [4, 85], strides = [1, 1]} : vector<4x121xf32> to vector<4x85xf32>
    %67 = vector.extract_strided_slice %58 {offsets = [0, 22], sizes = [4, 85], strides = [1, 1]} : vector<4x121xf32> to vector<4x85xf32>
    %68 = vector.extract_strided_slice %58 {offsets = [0, 23], sizes = [4, 85], strides = [1, 1]} : vector<4x121xf32> to vector<4x85xf32>
    %69 = vector.extract_strided_slice %58 {offsets = [0, 24], sizes = [4, 85], strides = [1, 1]} : vector<4x121xf32> to vector<4x85xf32>
    %70 = vector.extract_strided_slice %58 {offsets = [0, 25], sizes = [4, 85], strides = [1, 1]} : vector<4x121xf32> to vector<4x85xf32>
    %71 = vector.extract_strided_slice %58 {offsets = [0, 33], sizes = [4, 85], strides = [1, 1]} : vector<4x121xf32> to vector<4x85xf32>
    %72 = vector.extract_strided_slice %58 {offsets = [0, 34], sizes = [4, 85], strides = [1, 1]} : vector<4x121xf32> to vector<4x85xf32>
    %73 = vector.extract_strided_slice %58 {offsets = [0, 35], sizes = [4, 85], strides = [1, 1]} : vector<4x121xf32> to vector<4x85xf32>
    %74 = vector.extract_strided_slice %58 {offsets = [0, 36], sizes = [4, 85], strides = [1, 1]} : vector<4x121xf32> to vector<4x85xf32>
    %75 = tpu.concatenate %59, %60, %61, %62, %63, %64, %65, %66, %67, %68, %69, %70, %71, %72, %73, %74 in 0 : vector<4x85xf32>, vector<4x85xf32>, vector<4x85xf32>, vector<4x85xf32>, vector<4x85xf32>, vector<4x85xf32>, vector<4x85xf32>, vector<4x85xf32>, vector<4x85xf32>, vector<4x85xf32>, vector<4x85xf32>, vector<4x85xf32>, vector<4x85xf32>, vector<4x85xf32>, vector<4x85xf32>, vector<4x85xf32> -> vector<64x85xf32>
    %76 = tpu.concatenate %18, %37, %56, %75 in 0 : vector<64x85xf32>, vector<64x85xf32>, vector<64x85xf32>, vector<64x85xf32> -> vector<256x85xf32>
    %c0_12 = arith.constant 0 : index
    %c0_13 = arith.constant 0 : index
    %77 = vector.load %arg2[%c0_12, %c0_13] : memref<4x256xf32, #tpu.memory_space<vmem>>, vector<4x256xf32>
    %cst = arith.constant dense<0.000000e+00> : vector<4x85xf32>
    %78 = tpu.matmul %77, %76, %cst {dimension_numbers = #tpu.dot_dimension_numbers<[1], [0], [0], [1], [0, 0, 1, 1], [], []>} : vector<4x256xf32>, vector<256x85xf32>, vector<4x85xf32> -> vector<4x85xf32>
    %c0_14 = arith.constant 0 : index
    %c0_15 = arith.constant 0 : index
    %79 = vector.load %arg3[%c0_14, %c0_15] : memref<4x1xf32, #tpu.memory_space<vmem>>, vector<4x1xf32>
    %80 = vector.broadcast %79 : vector<4x1xf32> to vector<4x85xf32>
    %81 = arith.addf %78, %80 : vector<4x85xf32>
    %cst_16 = arith.constant 0.000000e+00 : f32
    %82 = vector.broadcast %cst_16 : f32 to vector<4x85xf32>
    %83 = arith.maximumf %81, %82 : vector<4x85xf32>
    %84 = vector.extract_strided_slice %83 {offsets = [0, 0], sizes = [4, 8], strides = [1, 1]} : vector<4x85xf32> to vector<4x8xf32>
    %85 = vector.extract_strided_slice %83 {offsets = [0, 11], sizes = [4, 8], strides = [1, 1]} : vector<4x85xf32> to vector<4x8xf32>
    %86 = vector.extract_strided_slice %83 {offsets = [0, 22], sizes = [4, 8], strides = [1, 1]} : vector<4x85xf32> to vector<4x8xf32>
    %87 = vector.extract_strided_slice %83 {offsets = [0, 33], sizes = [4, 8], strides = [1, 1]} : vector<4x85xf32> to vector<4x8xf32>
    %88 = vector.extract_strided_slice %83 {offsets = [0, 44], sizes = [4, 8], strides = [1, 1]} : vector<4x85xf32> to vector<4x8xf32>
    %89 = vector.extract_strided_slice %83 {offsets = [0, 55], sizes = [4, 8], strides = [1, 1]} : vector<4x85xf32> to vector<4x8xf32>
    %90 = vector.extract_strided_slice %83 {offsets = [0, 66], sizes = [4, 8], strides = [1, 1]} : vector<4x85xf32> to vector<4x8xf32>
    %91 = vector.extract_strided_slice %83 {offsets = [0, 77], sizes = [4, 8], strides = [1, 1]} : vector<4x85xf32> to vector<4x8xf32>
    %92 = vector.extract_strided_slice %84 {offsets = [0, 0], sizes = [4, 1], strides = [1, 1]} : vector<4x8xf32> to vector<4x1xf32>
    %93 = vector.extract_strided_slice %84 {offsets = [0, 7], sizes = [4, 1], strides = [1, 1]} : vector<4x8xf32> to vector<4x1xf32>
    %94 = tpu.concatenate %92, %84, %93 in 1 : vector<4x1xf32>, vector<4x8xf32>, vector<4x1xf32> -> vector<4x10xf32>
    %95 = vector.extract_strided_slice %85 {offsets = [0, 0], sizes = [4, 1], strides = [1, 1]} : vector<4x8xf32> to vector<4x1xf32>
    %96 = vector.extract_strided_slice %85 {offsets = [0, 7], sizes = [4, 1], strides = [1, 1]} : vector<4x8xf32> to vector<4x1xf32>
    %97 = tpu.concatenate %95, %85, %96 in 1 : vector<4x1xf32>, vector<4x8xf32>, vector<4x1xf32> -> vector<4x10xf32>
    %98 = vector.extract_strided_slice %86 {offsets = [0, 0], sizes = [4, 1], strides = [1, 1]} : vector<4x8xf32> to vector<4x1xf32>
    %99 = vector.extract_strided_slice %86 {offsets = [0, 7], sizes = [4, 1], strides = [1, 1]} : vector<4x8xf32> to vector<4x1xf32>
    %100 = tpu.concatenate %98, %86, %99 in 1 : vector<4x1xf32>, vector<4x8xf32>, vector<4x1xf32> -> vector<4x10xf32>
    %101 = vector.extract_strided_slice %87 {offsets = [0, 0], sizes = [4, 1], strides = [1, 1]} : vector<4x8xf32> to vector<4x1xf32>
    %102 = vector.extract_strided_slice %87 {offsets = [0, 7], sizes = [4, 1], strides = [1, 1]} : vector<4x8xf32> to vector<4x1xf32>
    %103 = tpu.concatenate %101, %87, %102 in 1 : vector<4x1xf32>, vector<4x8xf32>, vector<4x1xf32> -> vector<4x10xf32>
    %104 = vector.extract_strided_slice %88 {offsets = [0, 0], sizes = [4, 1], strides = [1, 1]} : vector<4x8xf32> to vector<4x1xf32>
    %105 = vector.extract_strided_slice %88 {offsets = [0, 7], sizes = [4, 1], strides = [1, 1]} : vector<4x8xf32> to vector<4x1xf32>
    %106 = tpu.concatenate %104, %88, %105 in 1 : vector<4x1xf32>, vector<4x8xf32>, vector<4x1xf32> -> vector<4x10xf32>
    %107 = vector.extract_strided_slice %89 {offsets = [0, 0], sizes = [4, 1], strides = [1, 1]} : vector<4x8xf32> to vector<4x1xf32>
    %108 = vector.extract_strided_slice %89 {offsets = [0, 7], sizes = [4, 1], strides = [1, 1]} : vector<4x8xf32> to vector<4x1xf32>
    %109 = tpu.concatenate %107, %89, %108 in 1 : vector<4x1xf32>, vector<4x8xf32>, vector<4x1xf32> -> vector<4x10xf32>
    %110 = vector.extract_strided_slice %90 {offsets = [0, 0], sizes = [4, 1], strides = [1, 1]} : vector<4x8xf32> to vector<4x1xf32>
    %111 = vector.extract_strided_slice %90 {offsets = [0, 7], sizes = [4, 1], strides = [1, 1]} : vector<4x8xf32> to vector<4x1xf32>
    %112 = tpu.concatenate %110, %90, %111 in 1 : vector<4x1xf32>, vector<4x8xf32>, vector<4x1xf32> -> vector<4x10xf32>
    %113 = vector.extract_strided_slice %91 {offsets = [0, 0], sizes = [4, 1], strides = [1, 1]} : vector<4x8xf32> to vector<4x1xf32>
    %114 = vector.extract_strided_slice %91 {offsets = [0, 7], sizes = [4, 1], strides = [1, 1]} : vector<4x8xf32> to vector<4x1xf32>
    %115 = tpu.concatenate %113, %91, %114 in 1 : vector<4x1xf32>, vector<4x8xf32>, vector<4x1xf32> -> vector<4x10xf32>
    %116 = tpu.concatenate %94, %94, %97, %100, %103, %106, %109, %112, %115, %115 in 1 : vector<4x10xf32>, vector<4x10xf32>, vector<4x10xf32>, vector<4x10xf32>, vector<4x10xf32>, vector<4x10xf32>, vector<4x10xf32>, vector<4x10xf32>, vector<4x10xf32>, vector<4x10xf32> -> vector<4x100xf32>
    %117 = vector.extract_strided_slice %116 {offsets = [0, 0], sizes = [4, 78], strides = [1, 1]} : vector<4x100xf32> to vector<4x78xf32>
    %118 = vector.extract_strided_slice %116 {offsets = [0, 1], sizes = [4, 78], strides = [1, 1]} : vector<4x100xf32> to vector<4x78xf32>
    %119 = vector.extract_strided_slice %116 {offsets = [0, 2], sizes = [4, 78], strides = [1, 1]} : vector<4x100xf32> to vector<4x78xf32>
    %120 = vector.extract_strided_slice %116 {offsets = [0, 10], sizes = [4, 78], strides = [1, 1]} : vector<4x100xf32> to vector<4x78xf32>
    %121 = vector.extract_strided_slice %116 {offsets = [0, 11], sizes = [4, 78], strides = [1, 1]} : vector<4x100xf32> to vector<4x78xf32>
    %122 = vector.extract_strided_slice %116 {offsets = [0, 12], sizes = [4, 78], strides = [1, 1]} : vector<4x100xf32> to vector<4x78xf32>
    %123 = vector.extract_strided_slice %116 {offsets = [0, 20], sizes = [4, 78], strides = [1, 1]} : vector<4x100xf32> to vector<4x78xf32>
    %124 = vector.extract_strided_slice %116 {offsets = [0, 21], sizes = [4, 78], strides = [1, 1]} : vector<4x100xf32> to vector<4x78xf32>
    %125 = vector.extract_strided_slice %116 {offsets = [0, 22], sizes = [4, 78], strides = [1, 1]} : vector<4x100xf32> to vector<4x78xf32>
    %126 = tpu.concatenate %117, %118, %119, %120, %121, %122, %123, %124, %125 in 0 : vector<4x78xf32>, vector<4x78xf32>, vector<4x78xf32>, vector<4x78xf32>, vector<4x78xf32>, vector<4x78xf32>, vector<4x78xf32>, vector<4x78xf32>, vector<4x78xf32> -> vector<36x78xf32>
    %c0_17 = arith.constant 0 : index
    %c0_18 = arith.constant 0 : index
    %127 = vector.load %arg4[%c0_17, %c0_18] : memref<4x36xf32, #tpu.memory_space<vmem>>, vector<4x36xf32>
    %cst_19 = arith.constant dense<0.000000e+00> : vector<4x78xf32>
    %128 = tpu.matmul %127, %126, %cst_19 {dimension_numbers = #tpu.dot_dimension_numbers<[1], [0], [0], [1], [0, 0, 1, 1], [], []>} : vector<4x36xf32>, vector<36x78xf32>, vector<4x78xf32> -> vector<4x78xf32>
    %c0_20 = arith.constant 0 : index
    %c0_21 = arith.constant 0 : index
    %129 = vector.load %arg5[%c0_20, %c0_21] : memref<4x1xf32, #tpu.memory_space<vmem>>, vector<4x1xf32>
    %130 = vector.broadcast %129 : vector<4x1xf32> to vector<4x78xf32>
    %131 = arith.addf %128, %130 : vector<4x78xf32>
    %cst_22 = arith.constant 0.000000e+00 : f32
    %132 = vector.broadcast %cst_22 : f32 to vector<4x78xf32>
    %133 = arith.maximumf %131, %132 : vector<4x78xf32>
    %134 = vector.extract_strided_slice %133 {offsets = [0, 0], sizes = [4, 8], strides = [1, 1]} : vector<4x78xf32> to vector<4x8xf32>
    %135 = vector.extract_strided_slice %133 {offsets = [0, 10], sizes = [4, 8], strides = [1, 1]} : vector<4x78xf32> to vector<4x8xf32>
    %136 = vector.extract_strided_slice %133 {offsets = [0, 20], sizes = [4, 8], strides = [1, 1]} : vector<4x78xf32> to vector<4x8xf32>
    %137 = vector.extract_strided_slice %133 {offsets = [0, 30], sizes = [4, 8], strides = [1, 1]} : vector<4x78xf32> to vector<4x8xf32>
    %138 = vector.extract_strided_slice %133 {offsets = [0, 40], sizes = [4, 8], strides = [1, 1]} : vector<4x78xf32> to vector<4x8xf32>
    %139 = vector.extract_strided_slice %133 {offsets = [0, 50], sizes = [4, 8], strides = [1, 1]} : vector<4x78xf32> to vector<4x8xf32>
    %140 = vector.extract_strided_slice %133 {offsets = [0, 60], sizes = [4, 8], strides = [1, 1]} : vector<4x78xf32> to vector<4x8xf32>
    %141 = vector.extract_strided_slice %133 {offsets = [0, 70], sizes = [4, 8], strides = [1, 1]} : vector<4x78xf32> to vector<4x8xf32>
    %142 = tpu.concatenate %134, %135, %136, %137, %138, %139, %140, %141 in 1 : vector<4x8xf32>, vector<4x8xf32>, vector<4x8xf32>, vector<4x8xf32>, vector<4x8xf32>, vector<4x8xf32>, vector<4x8xf32>, vector<4x8xf32> -> vector<4x64xf32>
    %c0_23 = arith.constant 0 : index
    %c0_24 = arith.constant 0 : index
    %c0_25 = arith.constant 0 : index
    %143 = vector.load %arg6[%c0_23, %c0_24, %c0_25] : memref<1x4x64xf32, #tpu.memory_space<vmem>>, vector<1x4x64xf32>
    %144 = vector.shape_cast %143 : vector<1x4x64xf32> to vector<4x64xf32>
    %145 = vector.shape_cast %142 : vector<4x64xf32> to vector<1x4x64xf32>
    tpu.vector_store %arg6[%c0_23, %c0_24, %c0_25], %145 {strides = array<i32>} : memref<1x4x64xf32, #tpu.memory_space<vmem>>, vector<1x4x64xf32>,
    return
  }
  func.func @transform_0(%arg0: i32) -> (i32, i32, i32, i32) {
    %c0_i32 = arith.constant 0 : i32
    %c0_i32_0 = arith.constant 0 : i32
    %c0_i32_1 = arith.constant 0 : i32
    %c0_i32_2 = arith.constant 0 : i32
    return %arg0, %c0_i32, %c0_i32_0, %c0_i32_1 : i32, i32, i32, i32
  }
  func.func @transform_1(%arg0: i32) -> (i32, i32) {
    %c0_i32 = arith.constant 0 : i32
    %c0_i32_0 = arith.constant 0 : i32
    %c0_i32_1 = arith.constant 0 : i32
    return %c0_i32, %c0_i32_0 : i32, i32
  }
  func.func @transform_2(%arg0: i32) -> (i32, i32) {
    %c0_i32 = arith.constant 0 : i32
    %c0_i32_0 = arith.constant 0 : i32
    %c0_i32_1 = arith.constant 0 : i32
    return %c0_i32, %c0_i32_0 : i32, i32
  }
  func.func @transform_3(%arg0: i32) -> (i32, i32) {
    %c0_i32 = arith.constant 0 : i32
    %c0_i32_0 = arith.constant 0 : i32
    %c0_i32_1 = arith.constant 0 : i32
    return %c0_i32, %c0_i32_0 : i32, i32
  }
  func.func @transform_4(%arg0: i32) -> (i32, i32) {
    %c0_i32 = arith.constant 0 : i32
    %c0_i32_0 = arith.constant 0 : i32
    %c0_i32_1 = arith.constant 0 : i32
    return %c0_i32, %c0_i32_0 : i32, i32
  }
  func.func @transform_5(%arg0: i32) -> (i32, i32, i32) {
    %c0_i32 = arith.constant 0 : i32
    %c0_i32_0 = arith.constant 0 : i32
    %c0_i32_1 = arith.constant 0 : i32
    return %arg0, %c0_i32, %c0_i32_0 : i32, i32, i32
  }
}

</mosaic_0001>

<llo_original>
// kernel: convolution_downscale_forward.1
$region0: #{convolution_downscale_forward.1}
  #allocation0 [shape = 'u32[]', space=smem, size = 0x4, offset = 0x4, fixed_abs, tag = 'smem constant byte address 0x4 - core index']
  #allocation1 [shape = 'u32[72,128]{1,0:T(1,128)}', space=vmem, size = 0x9000, scoped, tag = 'internal scratch']
  %s0 = inlined_call_operand.vmem [shape: f32[2,4,4,121], index: 0, kind: input, shape index: {}]
  %s1 = inlined_call_operand.vmem [shape: f32[4,256], index: 1, kind: input, shape index: {}]
  %s2 = inlined_call_operand.vmem [shape: f32[4,1], index: 2, kind: input, shape index: {}]
  %s3 = inlined_call_operand.vmem [shape: f32[4,36], index: 3, kind: input, shape index: {}]
  %s4 = inlined_call_operand.vmem [shape: f32[4,1], index: 4, kind: input, shape index: {}]
  %s5 = inlined_call_operand.vmem [shape: f32[2,4,64], index: 5, kind: output, shape index: {}]
  %s6 = sld [smem:[#allocation0]]
  $region53: #{convolution_downscale_forward.1} parent=0
    _
  %s8 = ssub.s32 1, %s6
  %s9 = scalar_select 0, %s8, %s6
  loop: start=0, step=1, limit=4
  $region2: #{convolution_downscale_forward.1} parent=0 // loop_pre_header
    _
  $region3: #{convolution_downscale_forward.1} parent=0 // loop_header
    %s11 = sphi 0, %s15
    %p12 = scmp.ge.s32.totalorder %s11, 4
    %s21 = sphi 0, %s23
    %s24 = sphi 0, %s21
    %s25 = sphi 0, %s24
    %s41 = sphi 0, %s25
    %s45 = sphi 0, %s45
    %s47 = sphi 0, %s45
    %s48 = sphi 0, %s47
    %s62 = sphi 0, %s48
    %s66 = sphi 0, %s66
    %s68 = sphi 0, %s66
    %s69 = sphi 0, %s68
    %s83 = sphi 0, %s69
    %s87 = sphi 0, %s87
    %s89 = sphi 0, %s87
    %s90 = sphi 0, %s89
    %s104 = sphi 0, %s90
    %s108 = sphi 0, %s108
    %s110 = sphi 0, %s108
    %s111 = sphi 0, %s110
    %s125 = sphi 0, %s111
    %s131 = sphi 0, %s133
    %s134 = sphi 0, %s131
    %s135 = sphi 0, %s134
    %s151 = sphi 0, %s135
  $region4: #{convolution_downscale_forward.1} parent=0 // loop_header_branch
    %14 = sbr.rel (%p12) target = $region8
  $region5: #{convolution_downscale_forward.1} parent=0 // loop_body
    %s16 = ssub.s32 %s11, 1
    %s17 = ssub.s32 %s11, 2
    %s18 = sadd.s32 %s11, 1
    %s19 = ssub.s32 %s11, %s18
    %p20 = scmp.eq.s32.totalorder %s19, 0
    %s22 = sadd.s32 %s21, 1
    %s23 = scalar_select %p20, %s21, %s22
    %p26 = pneg %p20
    %p27 = scmp.eq.s32.totalorder %s11, 1
    %p28 = por %p26, %p27
    %p29 = scmp.ne.s32.totalorder %s21, %s24
    %p30 = scmp.eq.s32.totalorder %s11, 0
    %p31 = por %p29, %p30
    %p32 = scmp.ne.s32.totalorder %s21, %s24
    %p33 = scmp.eq.s32.totalorder %s16, 1
    %p34 = por %p32, %p33
    %p35 = scmp.ne.s32.totalorder %s24, %s25
    %p36 = scmp.eq.s32.totalorder %s16, 0
    %p37 = por %p35, %p36
    %p38 = scmp.ne.s32.totalorder %s24, %s25
    %p39 = scmp.eq.s32.totalorder %s17, 1
    %p40 = por %p38, %p39
    %p42 = scmp.ne.s32.totalorder %s25, %s41
    %p43 = scmp.eq.s32.totalorder %s17, 0
    %p44 = por %p42, %p43
    %s46 = sadd.s32 %s45, 1
    %p49 = scmp.eq.s32.totalorder %s11, 1
    %p50 = scmp.ne.s32.totalorder %s45, %s47
    %p51 = scmp.eq.s32.totalorder %s11, 0
    %p52 = por %p50, %p51
    %p53 = scmp.ne.s32.totalorder %s45, %s47
    %p54 = scmp.eq.s32.totalorder %s16, 1
    %p55 = por %p53, %p54
    %p56 = scmp.ne.s32.totalorder %s47, %s48
    %p57 = scmp.eq.s32.totalorder %s16, 0
    %p58 = por %p56, %p57
    %p59 = scmp.ne.s32.totalorder %s47, %s48
    %p60 = scmp.eq.s32.totalorder %s17, 1
    %p61 = por %p59, %p60
    %p63 = scmp.ne.s32.totalorder %s48, %s62
    %p64 = scmp.eq.s32.totalorder %s17, 0
    %p65 = por %p63, %p64
    %s67 = sadd.s32 %s66, 1
    %p70 = scmp.eq.s32.totalorder %s11, 1
    %p71 = scmp.ne.s32.totalorder %s66, %s68
    %p72 = scmp.eq.s32.totalorder %s11, 0
    %p73 = por %p71, %p72
    %p74 = scmp.ne.s32.totalorder %s66, %s68
    %p75 = scmp.eq.s32.totalorder %s16, 1
    %p76 = por %p74, %p75
    %p77 = scmp.ne.s32.totalorder %s68, %s69
    %p78 = scmp.eq.s32.totalorder %s16, 0
    %p79 = por %p77, %p78
    %p80 = scmp.ne.s32.totalorder %s68, %s69
    %p81 = scmp.eq.s32.totalorder %s17, 1
    %p82 = por %p80, %p81
    %p84 = scmp.ne.s32.totalorder %s69, %s83
    %p85 = scmp.eq.s32.totalorder %s17, 0
    %p86 = por %p84, %p85
    %s88 = sadd.s32 %s87, 1
    %p91 = scmp.eq.s32.totalorder %s11, 1
    %p92 = scmp.ne.s32.totalorder %s87, %s89
    %p93 = scmp.eq.s32.totalorder %s11, 0
    %p94 = por %p92, %p93
    %p95 = scmp.ne.s32.totalorder %s87, %s89
    %p96 = scmp.eq.s32.totalorder %s16, 1
    %p97 = por %p95, %p96
    %p98 = scmp.ne.s32.totalorder %s89, %s90
    %p99 = scmp.eq.s32.totalorder %s16, 0
    %p100 = por %p98, %p99
    %p101 = scmp.ne.s32.totalorder %s89, %s90
    %p102 = scmp.eq.s32.totalorder %s17, 1
    %p103 = por %p101, %p102
    %p105 = scmp.ne.s32.totalorder %s90, %s104
    %p106 = scmp.eq.s32.totalorder %s17, 0
    %p107 = por %p105, %p106
    %s109 = sadd.s32 %s108, 1
    %p112 = scmp.eq.s32.totalorder %s11, 1
    %p113 = scmp.ne.s32.totalorder %s108, %s110
    %p114 = scmp.eq.s32.totalorder %s11, 0
    %p115 = por %p113, %p114
    %p116 = scmp.ne.s32.totalorder %s108, %s110
    %p117 = scmp.eq.s32.totalorder %s16, 1
    %p118 = por %p116, %p117
    %p119 = scmp.ne.s32.totalorder %s110, %s111
    %p120 = scmp.eq.s32.totalorder %s16, 0
    %p121 = por %p119, %p120
    %p122 = scmp.ne.s32.totalorder %s110, %s111
    %p123 = scmp.eq.s32.totalorder %s17, 1
    %p124 = por %p122, %p123
    %p126 = scmp.ne.s32.totalorder %s111, %s125
    %p127 = scmp.eq.s32.totalorder %s17, 0
    %p128 = por %p126, %p127
    %s129 = ssub.s32 %s11, %s18
    %p130 = scmp.eq.s32.totalorder %s129, 0
    %s132 = sadd.s32 %s131, 1
    %s133 = scalar_select %p130, %s131, %s132
    %p136 = pneg %p130
    %p137 = scmp.eq.s32.totalorder %s11, 1
    %p138 = por %p136, %p137
    %p139 = scmp.ne.s32.totalorder %s131, %s134
    %p140 = scmp.eq.s32.totalorder %s11, 0
    %p141 = por %p139, %p140
    %p142 = scmp.ne.s32.totalorder %s131, %s134
    %p143 = scmp.eq.s32.totalorder %s16, 1
    %p144 = por %p142, %p143
    %p145 = scmp.ne.s32.totalorder %s134, %s135
    %p146 = scmp.eq.s32.totalorder %s16, 0
    %p147 = por %p145, %p146
    %p148 = scmp.ne.s32.totalorder %s134, %s135
    %p149 = scmp.eq.s32.totalorder %s17, 1
    %p150 = por %p148, %p149
    %p152 = scmp.ne.s32.totalorder %s135, %s151
    %p153 = scmp.eq.s32.totalorder %s17, 0
    %p154 = por %p152, %p153
    %p155 = scmp.le.s32.totalorder 1, %s11
    %p156 = scmp.lt.s32.totalorder %s11, 3
    %p157 = pnand %p155, %p156
    %p158 = pneg %p157
    // Predicated region
    $region9: #{convolution_downscale_forward.1} parent=5 // pred_check
      _
    $region10: #{convolution_downscale_forward.1} parent=5 // pred_check_branch
      %160 = sbr.rel (%p157) target = $region12
    $region11: #{convolution_downscale_forward.1} parent=5 // pred_region
      %s161 = ssub.s32 %s11, 1
      // Predicated region
      $region13: #{convolution_downscale_forward.1} parent=11 // pred_check
        %p162 = pneg %p58
      $region14: #{convolution_downscale_forward.1} parent=11 // pred_check_branch
        %164 = sbr.rel (%p162) target = $region16
      $region15: #{convolution_downscale_forward.1} parent=11 // pred_region
        _
      $region16: #{convolution_downscale_forward.1} parent=11 // pred_fallthru
        _
      // Predicated region
      $region17: #{convolution_downscale_forward.1} parent=11 // pred_check
        %p165 = pneg %p79
      $region18: #{convolution_downscale_forward.1} parent=11 // pred_check_branch
        %167 = sbr.rel (%p165) target = $region20
      $region19: #{convolution_downscale_forward.1} parent=11 // pred_region
        _
      $region20: #{convolution_downscale_forward.1} parent=11 // pred_fallthru
        _
      // Predicated region
      $region21: #{convolution_downscale_forward.1} parent=11 // pred_check
        %p168 = pneg %p100
      $region22: #{convolution_downscale_forward.1} parent=11 // pred_check_branch
        %170 = sbr.rel (%p168) target = $region24
      $region23: #{convolution_downscale_forward.1} parent=11 // pred_region
        _
      $region24: #{convolution_downscale_forward.1} parent=11 // pred_fallthru
        _
      // Predicated region
      $region25: #{convolution_downscale_forward.1} parent=11 // pred_check
        %p171 = pneg %p121
      $region26: #{convolution_downscale_forward.1} parent=11 // pred_check_branch
        %173 = sbr.rel (%p171) target = $region28
      $region27: #{convolution_downscale_forward.1} parent=11 // pred_region
        _
      $region28: #{convolution_downscale_forward.1} parent=11 // pred_fallthru
        _
    $region12: #{convolution_downscale_forward.1} parent=5 // pred_fallthru
      _
    %p174 = scmp.lt.s32.totalorder %s11, 2
    // Predicated region
    $region29: #{convolution_downscale_forward.1} parent=5 // pred_check
      %p175 = pneg %p174
    $region30: #{convolution_downscale_forward.1} parent=5 // pred_check_branch
      %177 = sbr.rel (%p175) target = $region32
    $region31: #{convolution_downscale_forward.1} parent=5 // pred_region
      // Predicated region
      $region33: #{convolution_downscale_forward.1} parent=31 // pred_check
        %p178 = pneg %p31
      $region34: #{convolution_downscale_forward.1} parent=31 // pred_check_branch
        %180 = sbr.rel (%p178) target = $region36
      $region35: #{convolution_downscale_forward.1} parent=31 // pred_region
        %p181 = scmp.lt.s32.totalorder %s11, 1
        %s182 = scalar_select %p181, %s11, 1
        %s183 = smul.addr %s182, 4
        %s184 = smul.addr %s183, 4
        %s185 = scalar_lea.vmem %s0, %s184
      $region36: #{convolution_downscale_forward.1} parent=31 // pred_fallthru
        _
    $region32: #{convolution_downscale_forward.1} parent=5 // pred_fallthru
      _
    %p186 = scmp.le.s32.totalorder 1, %s11
    %p187 = scmp.lt.s32.totalorder %s11, 3
    %p188 = pnand %p186, %p187
    %p189 = pneg %p188
    // Predicated region
    $region37: #{convolution_downscale_forward.1} parent=5 // pred_check
      _
    $region38: #{convolution_downscale_forward.1} parent=5 // pred_check_branch
      %191 = sbr.rel (%p188) target = $region40
    $region39: #{convolution_downscale_forward.1} parent=5 // pred_region
      %s192 = ssub.s32 %s11, 1
      %p193 = scmp.lt.s32.totalorder %s16, 1
      %s194 = scalar_select %p193, %s16, 1
      %s195 = smul.addr %s194, 4
      %s196 = smul.addr %s195, 4
      %s197 = scalar_lea.vmem %s0, %s196
      %p198 = pneg %p37
      %p199 = pneg %p34
      %p200 = pneg %p58
      %p201 = pneg %p55
      %p202 = pneg %p79
      %p203 = pneg %p76
      %p204 = pneg %p100
      %p205 = pneg %p97
      %p206 = pneg %p121
      %p207 = pneg %p118
      %p208 = pneg %p147
      %p209 = pneg %p144
      %p210 = scmp.lt.s32.totalorder %s16, 1
      %s211 = scalar_select %p210, %s16, 1
      %s212 = smul.addr %s211, 4
      %s213 = scalar_lea.vmem %s5, %s212
      %p214 = scmp.lt.s32.totalorder %s16, 1
      %s215 = scalar_select %p214, %s16, 1
      %s216 = smul.addr %s215, 4
      %s217 = smul.addr %s216, 4
      %s218 = scalar_lea.vmem %s0, %s217
      %p219 = scmp.lt.s32.totalorder %s16, 1
      %s220 = scalar_select %p219, %s16, 1
      %s221 = smul.addr %s220, 4
      %s222 = scalar_lea.vmem %s5, %s221
      %v223 = vld [vmem:[%s218] sm:$0xf]
      %v225 = vrot.slane %v223, 4
      %226 = vrot.lane.b32.xlu0 %v225, 127
      %v227 = vpop.permute.xlu0 %226
      %229 = vrot.lane.b32.xlu0 %v223, 126
      %v230 = vpop.permute.xlu0 %229
      %232 = vrot.lane.b32.xlu0 %v225, 125
      %v233 = vpop.permute.xlu0 %232
      %235 = vrot.lane.b32.xlu0 %v223, 117
      %v236 = vpop.permute.xlu0 %235
      %238 = vrot.lane.b32.xlu0 %v225, 116
      %v239 = vpop.permute.xlu0 %238
      %241 = vrot.lane.b32.xlu0 %v223, 115
      %v242 = vpop.permute.xlu0 %241
      %244 = vrot.lane.b32.xlu0 %v225, 114
      %v245 = vpop.permute.xlu0 %244
      %247 = vrot.lane.b32.xlu0 %v223, 106
      %v248 = vpop.permute.xlu0 %247
      %250 = vrot.lane.b32.xlu0 %v225, 105
      %v251 = vpop.permute.xlu0 %250
      %253 = vrot.lane.b32.xlu0 %v223, 104
      %v254 = vpop.permute.xlu0 %253
      %256 = vrot.lane.b32.xlu0 %v225, 103
      %v257 = vpop.permute.xlu0 %256
      %259 = vrot.lane.b32.xlu0 %v223, 95
      %v260 = vpop.permute.xlu0 %259
      %262 = vrot.lane.b32.xlu0 %v225, 94
      %v263 = vpop.permute.xlu0 %262
      %265 = vrot.lane.b32.xlu0 %v223, 93
      %v266 = vpop.permute.xlu0 %265
      %268 = vrot.lane.b32.xlu0 %v225, 92
      %v269 = vpop.permute.xlu0 %268
      %vm271 = vcmask 1043456
      %v272 = vsel %vm271, %v223, %v227
      %v273 = vsel %vm271, %v230, %v233
      %v274 = vsel %vm271, %v236, %v239
      %v275 = vsel %vm271, %v242, %v245
      %v276 = vsel %vm271, %v248, %v251
      %v277 = vsel %vm271, %v254, %v257
      %v278 = vsel %vm271, %v260, %v263
      %v279 = vsel %vm271, %v266, %v269
      %s280 = scalar_lea.vmem %s218, 4
      %v281 = vld [vmem:[%s280] sm:$0xf]
      %v283 = vrot.slane %v281, 4
      %284 = vrot.lane.b32.xlu0 %v283, 127
      %v285 = vpop.permute.xlu0 %284
      %287 = vrot.lane.b32.xlu0 %v281, 126
      %v288 = vpop.permute.xlu0 %287
      %290 = vrot.lane.b32.xlu0 %v283, 125
      %v291 = vpop.permute.xlu0 %290
      %293 = vrot.lane.b32.xlu0 %v281, 117
      %v294 = vpop.permute.xlu0 %293
      %296 = vrot.lane.b32.xlu0 %v283, 116
      %v297 = vpop.permute.xlu0 %296
      %299 = vrot.lane.b32.xlu0 %v281, 115
      %v300 = vpop.permute.xlu0 %299
      %302 = vrot.lane.b32.xlu0 %v283, 114
      %v303 = vpop.permute.xlu0 %302
      %305 = vrot.lane.b32.xlu0 %v281, 106
      %v306 = vpop.permute.xlu0 %305
      %308 = vrot.lane.b32.xlu0 %v283, 105
      %v309 = vpop.permute.xlu0 %308
      %311 = vrot.lane.b32.xlu0 %v281, 104
      %v312 = vpop.permute.xlu0 %311
      %314 = vrot.lane.b32.xlu0 %v283, 103
      %v315 = vpop.permute.xlu0 %314
      %317 = vrot.lane.b32.xlu0 %v281, 95
      %v318 = vpop.permute.xlu0 %317
      %320 = vrot.lane.b32.xlu0 %v283, 94
      %v321 = vpop.permute.xlu0 %320
      %323 = vrot.lane.b32.xlu0 %v281, 93
      %v324 = vpop.permute.xlu0 %323
      %326 = vrot.lane.b32.xlu0 %v283, 92
      %v327 = vpop.permute.xlu0 %326
      %v329 = vsel %vm271, %v281, %v285
      %v330 = vsel %vm271, %v288, %v291
      %v331 = vsel %vm271, %v294, %v297
      %v332 = vsel %vm271, %v300, %v303
      %v333 = vsel %vm271, %v306, %v309
      %v334 = vsel %vm271, %v312, %v315
      %v335 = vsel %vm271, %v318, %v321
      %v336 = vsel %vm271, %v324, %v327
      %s337 = scalar_lea.vmem %s218, 8
      %v338 = vld [vmem:[%s337] sm:$0xf]
      %v340 = vrot.slane %v338, 4
      %341 = vrot.lane.b32.xlu0 %v340, 127
      %v342 = vpop.permute.xlu0 %341
      %344 = vrot.lane.b32.xlu0 %v338, 126
      %v345 = vpop.permute.xlu0 %344
      %347 = vrot.lane.b32.xlu0 %v340, 125
      %v348 = vpop.permute.xlu0 %347
      %350 = vrot.lane.b32.xlu0 %v338, 117
      %v351 = vpop.permute.xlu0 %350
      %353 = vrot.lane.b32.xlu0 %v340, 116
      %v354 = vpop.permute.xlu0 %353
      %356 = vrot.lane.b32.xlu0 %v338, 115
      %v357 = vpop.permute.xlu0 %356
      %359 = vrot.lane.b32.xlu0 %v340, 114
      %v360 = vpop.permute.xlu0 %359
      %362 = vrot.lane.b32.xlu0 %v338, 106
      %v363 = vpop.permute.xlu0 %362
      %365 = vrot.lane.b32.xlu0 %v340, 105
      %v366 = vpop.permute.xlu0 %365
      %368 = vrot.lane.b32.xlu0 %v338, 104
      %v369 = vpop.permute.xlu0 %368
      %371 = vrot.lane.b32.xlu0 %v340, 103
      %v372 = vpop.permute.xlu0 %371
      %374 = vrot.lane.b32.xlu0 %v338, 95
      %v375 = vpop.permute.xlu0 %374
      %377 = vrot.lane.b32.xlu0 %v340, 94
      %v378 = vpop.permute.xlu0 %377
      %380 = vrot.lane.b32.xlu0 %v338, 93
      %v381 = vpop.permute.xlu0 %380
      %383 = vrot.lane.b32.xlu0 %v340, 92
      %v384 = vpop.permute.xlu0 %383
      %v386 = vsel %vm271, %v338, %v342
      %v387 = vsel %vm271, %v345, %v348
      %v388 = vsel %vm271, %v351, %v354
      %v389 = vsel %vm271, %v357, %v360
      %v390 = vsel %vm271, %v363, %v366
      %v391 = vsel %vm271, %v369, %v372
      %v392 = vsel %vm271, %v375, %v378
      %v393 = vsel %vm271, %v381, %v384
      %s394 = scalar_lea.vmem %s218, 12
      %v395 = vld [vmem:[%s394] sm:$0xf]
      %v397 = vrot.slane %v395, 4
      %398 = vrot.lane.b32.xlu0 %v397, 127
      %v399 = vpop.permute.xlu0 %398
      %401 = vrot.lane.b32.xlu0 %v395, 126
      %v402 = vpop.permute.xlu0 %401
      %404 = vrot.lane.b32.xlu0 %v397, 125
      %v405 = vpop.permute.xlu0 %404
      %407 = vrot.lane.b32.xlu0 %v395, 117
      %v408 = vpop.permute.xlu0 %407
      %410 = vrot.lane.b32.xlu0 %v397, 116
      %v411 = vpop.permute.xlu0 %410
      %413 = vrot.lane.b32.xlu0 %v395, 115
      %v414 = vpop.permute.xlu0 %413
      %416 = vrot.lane.b32.xlu0 %v397, 114
      %v417 = vpop.permute.xlu0 %416
      %419 = vrot.lane.b32.xlu0 %v395, 106
      %v420 = vpop.permute.xlu0 %419
      %422 = vrot.lane.b32.xlu0 %v397, 105
      %v423 = vpop.permute.xlu0 %422
      %425 = vrot.lane.b32.xlu0 %v395, 104
      %v426 = vpop.permute.xlu0 %425
      %428 = vrot.lane.b32.xlu0 %v397, 103
      %v429 = vpop.permute.xlu0 %428
      %431 = vrot.lane.b32.xlu0 %v395, 95
      %v432 = vpop.permute.xlu0 %431
      %434 = vrot.lane.b32.xlu0 %v397, 94
      %v435 = vpop.permute.xlu0 %434
      %437 = vrot.lane.b32.xlu0 %v395, 93
      %v438 = vpop.permute.xlu0 %437
      %440 = vrot.lane.b32.xlu0 %v397, 92
      %v441 = vpop.permute.xlu0 %440
      %v443 = vsel %vm271, %v395, %v399
      %v444 = vsel %vm271, %v402, %v405
      %v445 = vsel %vm271, %v408, %v411
      %v446 = vsel %vm271, %v414, %v417
      %v447 = vsel %vm271, %v420, %v423
      %v448 = vsel %vm271, %v426, %v429
      %v449 = vsel %vm271, %v432, %v435
      %v450 = vsel %vm271, %v438, %v441
      %v451 = vld [vmem:[%s1] sm:$0xff]
      %v452 = vld [vmem:[%s2] sm:$0xf]
      %454 = vset.pattern.permute.xlu0 0
      %455 = vperm.xlu0 %454, %v452
      %v456 = vpop.permute.xlu0 %455
      %459 = vst [vmem:[#allocation1] ss:$2 sm:$0xff] %v451
      %v460 = vld.sshfl [vmem:[#allocation1] sm:$0xff pattern:$0x75316420]
      %v461 = vld.sshfl [vmem:[#allocation1 + $0x8] sm:$0xff pattern:$0x75316420]
      %464 = vmatpush.msra.mxu0 %v336
      %465 = vmatpush.msra.mxu0 %v335
      %466 = vmatpush.msra.mxu0 %v334
      %467 = vmatpush.msra.mxu0 %v333
      %468 = vmatpush.msra.mxu0 %v332
      %469 = vmatpush.msra.mxu0 %v331
      %470 = vmatpush.msra.mxu0 %v330
      %471 = vmatpush.msra.mxu0 %v329
      %472 = vmatpush.msra.mxu0 %v279
      %473 = vmatpush.msra.mxu0 %v278
      %474 = vmatpush.msra.mxu0 %v277
      %475 = vmatpush.msra.mxu0 %v276
      %476 = vmatpush.msra.mxu0 %v275
      %477 = vmatpush.msra.mxu0 %v274
      %478 = vmatpush.msra.mxu0 %v273
      %479 = vmatpush.msra.mxu0 %v272
      %480 = vmatmul.f32.gmra.mxu0 %v460
      %v481 = vpop.f32.mrf.mxu0
      %v482 = vadd.f32 %v456, %v481
      %483 = vdwg.mxu0
      %484 = vmatpush.msra.mxu0 %v450
      %485 = vmatpush.msra.mxu0 %v449
      %486 = vmatpush.msra.mxu0 %v448
      %487 = vmatpush.msra.mxu0 %v447
      %488 = vmatpush.msra.mxu0 %v446
      %489 = vmatpush.msra.mxu0 %v445
      %490 = vmatpush.msra.mxu0 %v444
      %491 = vmatpush.msra.mxu0 %v443
      %492 = vmatpush.msra.mxu0 %v393
      %493 = vmatpush.msra.mxu0 %v392
      %494 = vmatpush.msra.mxu0 %v391
      %495 = vmatpush.msra.mxu0 %v390
      %496 = vmatpush.msra.mxu0 %v389
      %497 = vmatpush.msra.mxu0 %v388
      %498 = vmatpush.msra.mxu0 %v387
      %499 = vmatpush.msra.mxu0 %v386
      %500 = vmatmul.f32.gmra.mxu0 %v461
      %v501 = vpop.f32.mrf.mxu0
      %v502 = vadd.f32 %v482, %v501
      %503 = vdwg.mxu0
      %v504 = vmax.f32 %v502, 0.0
      %506 = vrot.lane.b32.xlu0 %v504, 1
      %v507 = vpop.permute.xlu0 %506
      %509 = vrot.lane.b32.xlu0 %v504, 2
      %v510 = vpop.permute.xlu0 %509
      %vm512 = vcmask 7168
      %v513 = vsel %vm512, %v504, %v507
      %vm514 = vcmask 72704
      %v515 = vsel %vm514, %v513, %v510
      %516 = vrot.lane.b32.xlu0 %v504, 117
      %v517 = vpop.permute.xlu0 %516
      %519 = vrot.lane.b32.xlu0 %v504, 118
      %v520 = vpop.permute.xlu0 %519
      %522 = vrot.lane.b32.xlu0 %v504, 119
      %v523 = vpop.permute.xlu0 %522
      %v525 = vsel %vm512, %v517, %v520
      %v526 = vsel %vm514, %v525, %v523
      %527 = vrot.lane.b32.xlu0 %v504, 106
      %v528 = vpop.permute.xlu0 %527
      %530 = vrot.lane.b32.xlu0 %v504, 107
      %v531 = vpop.permute.xlu0 %530
      %533 = vrot.lane.b32.xlu0 %v504, 108
      %v534 = vpop.permute.xlu0 %533
      %v536 = vsel %vm512, %v528, %v531
      %v537 = vsel %vm514, %v536, %v534
      %538 = vrot.lane.b32.xlu0 %v504, 95
      %v539 = vpop.permute.xlu0 %538
      %541 = vrot.lane.b32.xlu0 %v504, 96
      %v542 = vpop.permute.xlu0 %541
      %544 = vrot.lane.b32.xlu0 %v504, 97
      %v545 = vpop.permute.xlu0 %544
      %v547 = vsel %vm512, %v539, %v542
      %v548 = vsel %vm514, %v547, %v545
      %549 = vrot.lane.b32.xlu0 %v504, 84
      %v550 = vpop.permute.xlu0 %549
      %552 = vrot.lane.b32.xlu0 %v504, 85
      %v553 = vpop.permute.xlu0 %552
      %555 = vrot.lane.b32.xlu0 %v504, 86
      %v556 = vpop.permute.xlu0 %555
      %v558 = vsel %vm512, %v550, %v553
      %v559 = vsel %vm514, %v558, %v556
      %560 = vrot.lane.b32.xlu0 %v504, 73
      %v561 = vpop.permute.xlu0 %560
      %563 = vrot.lane.b32.xlu0 %v504, 74
      %v564 = vpop.permute.xlu0 %563
      %566 = vrot.lane.b32.xlu0 %v504, 75
      %v567 = vpop.permute.xlu0 %566
      %v569 = vsel %vm512, %v561, %v564
      %v570 = vsel %vm514, %v569, %v567
      %571 = vrot.lane.b32.xlu0 %v504, 62
      %v572 = vpop.permute.xlu0 %571
      %574 = vrot.lane.b32.xlu0 %v504, 63
      %v575 = vpop.permute.xlu0 %574
      %577 = vrot.lane.b32.xlu0 %v504, 64
      %v578 = vpop.permute.xlu0 %577
      %v580 = vsel %vm512, %v572, %v575
      %v581 = vsel %vm514, %v580, %v578
      %582 = vrot.lane.b32.xlu0 %v504, 51
      %v583 = vpop.permute.xlu0 %582
      %585 = vrot.lane.b32.xlu0 %v504, 52
      %v586 = vpop.permute.xlu0 %585
      %588 = vrot.lane.b32.xlu0 %v504, 53
      %v589 = vpop.permute.xlu0 %588
      %v591 = vsel %vm512, %v583, %v586
      %v592 = vsel %vm514, %v591, %v589
      %594 = vrot.lane.b32.xlu0 %v515, 10
      %v595 = vpop.permute.xlu0 %594
      %598 = vrot.lane.b32.xlu0 %v526, 20
      %v599 = vpop.permute.xlu0 %598
      %602 = vrot.lane.b32.xlu0 %v537, 30
      %v603 = vpop.permute.xlu0 %602
      %606 = vrot.lane.b32.xlu0 %v548, 40
      %v607 = vpop.permute.xlu0 %606
      %610 = vrot.lane.b32.xlu0 %v559, 50
      %v611 = vpop.permute.xlu0 %610
      %614 = vrot.lane.b32.xlu0 %v570, 60
      %v615 = vpop.permute.xlu0 %614
      %618 = vrot.lane.b32.xlu0 %v581, 70
      %v619 = vpop.permute.xlu0 %618
      %622 = vrot.lane.b32.xlu0 %v592, 80
      %v623 = vpop.permute.xlu0 %622
      %625 = vrot.lane.b32.xlu0 %v592, 90
      %v626 = vpop.permute.xlu0 %625
      %vm628 = vcmask 80896
      %v629 = vsel %vm628, %v515, %v595
      %vm630 = vcmask 162816
      %v631 = vsel %vm630, %v629, %v599
      %vm632 = vcmask 244736
      %v633 = vsel %vm632, %v631, %v603
      %vm634 = vcmask 326656
      %v635 = vsel %vm634, %v633, %v607
      %vm636 = vcmask 408576
      %v637 = vsel %vm636, %v635, %v611
      %vm638 = vcmask 490496
      %v639 = vsel %vm638, %v637, %v615
      %vm640 = vcmask 572416
      %v641 = vsel %vm640, %v639, %v619
      %vm642 = vcmask 654336
      %v643 = vsel %vm642, %v641, %v623
      %vm644 = vcmask 736256
      %v645 = vsel %vm644, %v643, %v626
      %v647 = vrot.slane %v645, 4
      %648 = vrot.lane.b32.xlu0 %v647, 127
      %v649 = vpop.permute.xlu0 %648
      %651 = vrot.lane.b32.xlu0 %v645, 126
      %v652 = vpop.permute.xlu0 %651
      %654 = vrot.lane.b32.xlu0 %v647, 118
      %v655 = vpop.permute.xlu0 %654
      %657 = vrot.lane.b32.xlu0 %v645, 117
      %v658 = vpop.permute.xlu0 %657
      %660 = vrot.lane.b32.xlu0 %v647, 116
      %v661 = vpop.permute.xlu0 %660
      %663 = vrot.lane.b32.xlu0 %v645, 108
      %v664 = vpop.permute.xlu0 %663
      %666 = vrot.lane.b32.xlu0 %v647, 107
      %v667 = vpop.permute.xlu0 %666
      %669 = vrot.lane.b32.xlu0 %v645, 106
      %v670 = vpop.permute.xlu0 %669
      %v671 = vsel %vm271, %v645, %v649
      %v672 = vsel %vm271, %v652, %v655
      %v673 = vsel %vm271, %v658, %v661
      %v674 = vsel %vm271, %v664, %v667
      %v675 = vld [vmem:[%s3] sm:$0xf]
      %v676 = vld [vmem:[%s4] sm:$0xf]
      %678 = vset.pattern.permute.xlu0 0
      %679 = vperm.xlu0 %678, %v676
      %v680 = vpop.permute.xlu0 %679
      %vm682 = vcmask 293888
      %v684 = vsel %vm682, %v675, 0
      %v686 = vsel %vm271, %v670, 0
      %688 = vmatpush.msra.mxu0 0.0
      %689 = vmatpush.msra.mxu0 0.0
      %690 = vmatpush.msra.mxu0 0.0
      %691 = vmatpush.msra.mxu0 0.0
      %692 = vmatpush.msra.mxu0 0.0
      %693 = vmatpush.msra.mxu0 0.0
      %694 = vmatpush.msra.mxu0 0.0
      %695 = vmatpush.msra.mxu0 0.0
      %696 = vmatpush.msra.mxu0 0.0
      %697 = vmatpush.msra.mxu0 0.0
      %698 = vmatpush.msra.mxu0 0.0
      %699 = vmatpush.msra.mxu0 %v686
      %700 = vmatpush.msra.mxu0 %v674
      %701 = vmatpush.msra.mxu0 %v673
      %702 = vmatpush.msra.mxu0 %v672
      %703 = vmatpush.msra.mxu0 %v671
      %704 = vmatmul.f32.gmra.mxu0 %v684
      %v705 = vpop.f32.mrf.mxu0
      %v706 = vadd.f32 %v680, %v705
      %707 = vdwg.mxu0
      %v708 = vmax.f32 %v706, 0.0
      %710 = vrot.lane.b32.xlu0 %v708, 126
      %v711 = vpop.permute.xlu0 %710
      %713 = vrot.lane.b32.xlu0 %v708, 124
      %v714 = vpop.permute.xlu0 %713
      %716 = vrot.lane.b32.xlu0 %v708, 122
      %v717 = vpop.permute.xlu0 %716
      %719 = vrot.lane.b32.xlu0 %v708, 120
      %v720 = vpop.permute.xlu0 %719
      %722 = vrot.lane.b32.xlu0 %v708, 118
      %v723 = vpop.permute.xlu0 %722
      %725 = vrot.lane.b32.xlu0 %v708, 116
      %v726 = vpop.permute.xlu0 %725
      %728 = vrot.lane.b32.xlu0 %v708, 114
      %v729 = vpop.permute.xlu0 %728
      %vm731 = vcmask 64512
      %v732 = vsel %vm731, %v708, %v711
      %vm733 = vcmask 130048
      %v734 = vsel %vm733, %v732, %v714
      %vm735 = vcmask 195584
      %v736 = vsel %vm735, %v734, %v717
      %vm737 = vcmask 261120
      %v738 = vsel %vm737, %v736, %v720
      %v739 = vsel %vm634, %v738, %v723
      %vm740 = vcmask 392192
      %v741 = vsel %vm740, %v739, %v726
      %vm742 = vcmask 457728
      %v743 = vsel %vm742, %v741, %v729
      %vm744 = vcmask 519168
      %745 = vst.msk [vmem:[%s222] sm:$0xf] %vm744, %v743
      %p746 = scmp.lt.s32.totalorder %s16, 1
      %s747 = scalar_select %p746, %s16, 1
      %s748 = smul.addr %s747, 4
      %s749 = scalar_lea.vmem %s5, %s748
      // Predicated region
      $region41: #{convolution_downscale_forward.1} parent=39 // pred_check
        %p750 = pneg %p144
      $region42: #{convolution_downscale_forward.1} parent=39 // pred_check_branch
        %752 = sbr.rel (%p750) target = $region44
      $region43: #{convolution_downscale_forward.1} parent=39 // pred_region
        _
      $region44: #{convolution_downscale_forward.1} parent=39 // pred_fallthru
        _
    $region40: #{convolution_downscale_forward.1} parent=5 // pred_fallthru
      _
    %p753 = scmp.le.s32.totalorder 2, %s11
    // Predicated region
    $region45: #{convolution_downscale_forward.1} parent=5 // pred_check
      %p754 = pneg %p753
    $region46: #{convolution_downscale_forward.1} parent=5 // pred_check_branch
      %756 = sbr.rel (%p754) target = $region48
    $region47: #{convolution_downscale_forward.1} parent=5 // pred_region
      %s757 = ssub.s32 %s11, 2
      // Predicated region
      $region49: #{convolution_downscale_forward.1} parent=47 // pred_check
        %p758 = pneg %p150
      $region50: #{convolution_downscale_forward.1} parent=47 // pred_check_branch
        %760 = sbr.rel (%p758) target = $region52
      $region51: #{convolution_downscale_forward.1} parent=47 // pred_region
        %p761 = scmp.lt.s32.totalorder %s17, 1
        %s762 = scalar_select %p761, %s17, 1
        %s763 = smul.addr %s762, 4
        %s764 = scalar_lea.vmem %s5, %s763
      $region52: #{convolution_downscale_forward.1} parent=47 // pred_fallthru
        _
    $region48: #{convolution_downscale_forward.1} parent=5 // pred_fallthru
      _
  $region6: #{convolution_downscale_forward.1} parent=0 // loop_footer
    %s15 = sadd.s32 1, %s11
  $region7: #{convolution_downscale_forward.1} parent=0 // loop_footer_branch
    %10 = sbr.rel target = $region3
  $region8: #{convolution_downscale_forward.1} parent=0 // loop_exit
    _

</llo_original>
